<compile_context>
chip_gen: v7x
topology: tpu7x:2x2x1
jax: 0.10.0
libtpu: 0.0.40
codegen_flags: <defaults>
</compile_context>

<pallas_src>
import jax
import jax.numpy as jnp
from jax.experimental import pallas as pl
from jax.experimental.pallas import tpu as pltpu


def _add_noise_kernel(x_ref, noise_ref, inv_snr_ref, out_ref):
    """One grid step handles B_TILE batch elements.

    x_ref       : VMEM (B_TILE, C, N) f32  -- signal
    noise_ref   : VMEM (B_TILE, 1, N) f32  -- raw (un-normalized) noise
    inv_snr_ref : VMEM (B_TILE, 1, 1) f32  -- 10**(-snr_db/20), precomputed on host
    out_ref     : VMEM (B_TILE, C, N) f32
    """
    x = x_ref[...]
    n = noise_ref[...]

    # Per-(batch, channel) signal RMS (lane-axis reduction).
    rms_x = jnp.sqrt(jnp.mean(x * x, axis=-1, keepdims=True))        # (B_TILE, C, 1)

    # RMS-normalize the noise with a fused rsqrt (EUP). The tiny epsilon keeps
    # all-zero noise mapping to zero, matching the reference's 1e-8-on-rms
    # guard to far below the output tolerance for any real noise.
    mean_n2 = jnp.mean(n * n, axis=-1, keepdims=True)                # (B_TILE, 1, 1)
    noise_norm = n * jax.lax.rsqrt(mean_n2 + 1e-16)                  # (B_TILE, 1, N)

    # gain = rms_x / 10**(snr_db/20); the SNR factor was hoisted to the host.
    gain = rms_x * inv_snr_ref[...]                                  # (B_TILE, C, 1)

    out_ref[...] = x + gain * noise_norm                             # (B_TILE, C, N)


def _pick_batches_per_block(B, C, N, itemsize,
                            target_hbm_bytes=2 << 20,
                            vmem_budget_bytes=12 << 20):
    """Choose how many batch elements each grid step processes.

    Goals: (a) move ~target_hbm_bytes of HBM data per step (amortize per-step
    overhead), (b) keep the double-buffered, sublane-padded VMEM footprint
    under vmem_budget_bytes (safe for v7x's 64 MiB VMEM), (c) keep >= 2 grid
    steps when the batch allows (both v7x TensorCores busy), (d) prefer
    B_TILE*C that is a multiple of 8 sublanes.
    """
    c_pad = -(-C // 8) * 8                                  # x/out pad C up to 8 sublanes
    hbm_per_batch = (2 * C + 1) * N * itemsize              # read x + noise, write out
    vmem_per_batch = 2 * (2 * c_pad + 8) * N * itemsize     # double-buffered x+out+noise

    divisors = [d for d in range(1, B + 1) if B % d == 0]
    aligned = [d for d in divisors if (d * C) % 8 == 0]
    for pool in (aligned, divisors):
        fits = [d for d in pool if d * vmem_per_batch <= vmem_budget_bytes]
        if not fits:
            continue
        multi = [d for d in fits if B // d >= 2] or fits
        big = [d for d in multi if d * hbm_per_batch >= target_hbm_bytes]
        return min(big) if big else max(multi)
    # TODO(synk): a single batch element exceeds the VMEM budget here; a
    # two-pass chunked-N kernel would be required. Fall back to 1 batch/step.
    return 1


def add_noise_pallas(x, noise, snr_db):
    """x: (B, C, N) f32, noise: (B, N) f32, snr_db: (B,) f32 -> (B, C, N) f32."""
    B, C, N = x.shape
    noise3 = noise.reshape(B, 1, N)

    # Hoist the per-example scalar SNR math out of the kernel (tiny host-side array).
    inv_snr = (10.0 ** (-snr_db.astype(jnp.float32) / 20.0)).reshape(B, 1, 1)
    inv_snr = inv_snr.astype(x.dtype)

    b_tile = _pick_batches_per_block(B, C, N, jnp.dtype(x.dtype).itemsize)
    grid = (B // b_tile,)

    return pl.pallas_call(
        _add_noise_kernel,
        out_shape=jax.ShapeDtypeStruct((B, C, N), x.dtype),
        grid=grid,
        in_specs=[
            pl.BlockSpec((b_tile, C, N), lambda i: (i, 0, 0)),   # x
            pl.BlockSpec((b_tile, 1, N), lambda i: (i, 0, 0)),   # raw noise
            pl.BlockSpec((b_tile, 1, 1), lambda i: (i, 0, 0)),   # 10**(-snr/20)
        ],
        out_specs=pl.BlockSpec((b_tile, C, N), lambda i: (i, 0, 0)),
        compiler_params=pltpu.CompilerParams(
            dimension_semantics=("parallel",),
            vmem_limit_bytes=32 * 1024 * 1024),
    )(x, noise3, inv_snr)


def add_noise_reference(x, noise, snr_db):
    """Plain-JAX reference with the module's semantics."""
    rms_x = jnp.sqrt(jnp.mean(x * x, axis=-1, keepdims=True))          # (B, C, 1)
    rms_n = jnp.sqrt(jnp.mean(noise * noise, axis=-1, keepdims=True))  # (B, 1)
    noise_norm = noise / (rms_n + 1e-8)                                # (B, N)
    gain = rms_x / (10.0 ** (snr_db[:, None, None] / 20.0))            # (B, C, 1)
    return x + gain * noise_norm[:, None, :]


if __name__ == "__main__":
    # Module config (mirrors AddNoise defaults): snr_db in [3, 30], p = 1.0
    # (p=1.0 -> augmentation always applied; p<1 would be a host-side mask).
    SNR_DB_MIN, SNR_DB_MAX = 3.0, 30.0

    B, C, N = 4, 4, 2048  # batch, channels, samples (N multiple of 128)

    key = jax.random.PRNGKey(0)
    k_x, k_noise, k_snr = jax.random.split(key, 3)

    x = jax.random.normal(k_x, (B, C, N), dtype=jnp.float32) * 0.3
    # Deterministic synthetic "background noise files", one snippet per example.
    noise = jax.random.normal(k_noise, (B, N), dtype=jnp.float32)
    # Per-example SNR sampled uniformly in [snr_db_min, snr_db_max].
    snr_db = jax.random.uniform(k_snr, (B,), dtype=jnp.float32,
                                minval=SNR_DB_MIN, maxval=SNR_DB_MAX)

    out = jax.block_until_ready(add_noise_pallas(x, noise, snr_db))

    ref = add_noise_reference(x, noise, snr_db)
    assert out.shape == (B, C, N) and out.dtype == jnp.float32
    assert jnp.allclose(out, ref, atol=1e-4, rtol=1e-4), "mismatch vs reference"

    print("KERNEL_OK")
</pallas_src>

<mosaic_0001>
module attributes {stable_mosaic.version = 11 : i64} {
  func.func @_add_noise_kernel(%arg0: i32, %arg1: memref<2x4x2048xf32, #tpu.memory_space<vmem>>, %arg2: memref<2x1x2048xf32, #tpu.memory_space<vmem>>, %arg3: memref<2x1x1xf32, #tpu.memory_space<vmem>>, %arg4: memref<2x4x2048xf32, #tpu.memory_space<vmem>>) attributes {dimension_semantics = [#tpu.dimension_semantics<parallel>], iteration_bounds = array<i64: 2>, scalar_prefetch = 0 : i64, scratch_operands = 0 : i64, tpu.core_type = #tpu.core_type<tc>, window_params = [{transform_indices = @transform_0, window_bounds = array<i64: 2, 4, 2048>}, {transform_indices = @transform_1, window_bounds = array<i64: 2, 1, 2048>}, {transform_indices = @transform_2, window_bounds = array<i64: 2, 1, 1>}, {transform_indices = @transform_3, window_bounds = array<i64: 2, 4, 2048>}]} {
    %c0 = arith.constant 0 : index
    %c0_0 = arith.constant 0 : index
    %c0_1 = arith.constant 0 : index
    %0 = vector.load %arg1[%c0, %c0_0, %c0_1] : memref<2x4x2048xf32, #tpu.memory_space<vmem>>, vector<2x4x2048xf32>
    %c0_2 = arith.constant 0 : index
    %c0_3 = arith.constant 0 : index
    %c0_4 = arith.constant 0 : index
    %1 = vector.load %arg2[%c0_2, %c0_3, %c0_4] : memref<2x1x2048xf32, #tpu.memory_space<vmem>>, vector<2x1x2048xf32>
    %2 = arith.mulf %0, %0 : vector<2x4x2048xf32>
    %cst = arith.constant dense<0.000000e+00> : vector<2x4xf32>
    %3 = vector.multi_reduction <add>, %2, %cst [2] : vector<2x4x2048xf32> to vector<2x4xf32>
    %4 = vector.shape_cast %3 : vector<2x4xf32> to vector<2x4x1xf32>
    %cst_5 = arith.constant 2.048000e+03 : f32
    %5 = vector.broadcast %cst_5 : f32 to vector<2x4x1xf32>
    %6 = arith.divf %4, %5 : vector<2x4x1xf32>
    %7 = math.sqrt %6 : vector<2x4x1xf32>
    %8 = arith.mulf %1, %1 : vector<2x1x2048xf32>
    %cst_6 = arith.constant dense<0.000000e+00> : vector<2x1xf32>
    %9 = vector.multi_reduction <add>, %8, %cst_6 [2] : vector<2x1x2048xf32> to vector<2x1xf32>
    %10 = vector.shape_cast %9 : vector<2x1xf32> to vector<2x1x1xf32>
    %cst_7 = arith.constant 2.048000e+03 : f32
    %11 = vector.broadcast %cst_7 : f32 to vector<2x1x1xf32>
    %12 = arith.divf %10, %11 : vector<2x1x1xf32>
    %cst_8 = arith.constant 1.000000e-16 : f32
    %13 = vector.broadcast %cst_8 : f32 to vector<2x1x1xf32>
    %14 = arith.addf %12, %13 : vector<2x1x1xf32>
    %15 = math.rsqrt %14 : vector<2x1x1xf32>
    %16 = vector.broadcast %15 : vector<2x1x1xf32> to vector<2x1x2048xf32>
    %17 = arith.mulf %1, %16 : vector<2x1x2048xf32>
    %c0_9 = arith.constant 0 : index
    %c0_10 = arith.constant 0 : index
    %c0_11 = arith.constant 0 : index
    %18 = vector.load %arg3[%c0_9, %c0_10, %c0_11] : memref<2x1x1xf32, #tpu.memory_space<vmem>>, vector<2x1x1xf32>
    %19 = vector.broadcast %18 : vector<2x1x1xf32> to vector<2x4x1xf32>
    %20 = arith.mulf %7, %19 : vector<2x4x1xf32>
    %21 = vector.broadcast %20 : vector<2x4x1xf32> to vector<2x4x2048xf32>
    %22 = vector.broadcast %17 : vector<2x1x2048xf32> to vector<2x4x2048xf32>
    %23 = arith.mulf %21, %22 : vector<2x4x2048xf32>
    %24 = arith.addf %0, %23 : vector<2x4x2048xf32>
    %c0_12 = arith.constant 0 : index
    %c0_13 = arith.constant 0 : index
    %c0_14 = arith.constant 0 : index
    %25 = vector.load %arg4[%c0_12, %c0_13, %c0_14] : memref<2x4x2048xf32, #tpu.memory_space<vmem>>, vector<2x4x2048xf32>
    tpu.vector_store %arg4[%c0_12, %c0_13, %c0_14], %24 {strides = array<i32>} : memref<2x4x2048xf32, #tpu.memory_space<vmem>>, vector<2x4x2048xf32>,
    return
  }
  func.func @transform_0(%arg0: i32) -> (i32, i32, i32) {
    %c0_i32 = arith.constant 0 : i32
    %c0_i32_0 = arith.constant 0 : i32
    %c0_i32_1 = arith.constant 0 : i32
    return %arg0, %c0_i32, %c0_i32_0 : i32, i32, i32
  }
  func.func @transform_1(%arg0: i32) -> (i32, i32, i32) {
    %c0_i32 = arith.constant 0 : i32
    %c0_i32_0 = arith.constant 0 : i32
    %c0_i32_1 = arith.constant 0 : i32
    return %arg0, %c0_i32, %c0_i32_0 : i32, i32, i32
  }
  func.func @transform_2(%arg0: i32) -> (i32, i32, i32) {
    %c0_i32 = arith.constant 0 : i32
    %c0_i32_0 = arith.constant 0 : i32
    %c0_i32_1 = arith.constant 0 : i32
    return %arg0, %c0_i32, %c0_i32_0 : i32, i32, i32
  }
  func.func @transform_3(%arg0: i32) -> (i32, i32, i32) {
    %c0_i32 = arith.constant 0 : i32
    %c0_i32_0 = arith.constant 0 : i32
    %c0_i32_1 = arith.constant 0 : i32
    return %arg0, %c0_i32, %c0_i32_0 : i32, i32, i32
  }
}

</mosaic_0001>

<llo_original>
// kernel: tpu_custom_call.1
$region0: #{tpu_custom_call.1}
  #allocation0 [shape = 'u32[]', space=smem, size = 0x4, offset = 0x4, fixed_abs, tag = 'smem constant byte address 0x4 - core index']
  #allocation1 [shape = 'u32[144,128]{1,0:T(1,128)}', space=vmem, size = 0x12000, scoped, tag = 'internal scratch']
  %s0 = inlined_call_operand.hbm [shape: f32[4,4,2048], index: 0, kind: input, shape index: {}]
  %s1 = inlined_call_operand.hbm [shape: f32[4,1,2048], index: 1, kind: input, shape index: {}]
  %s2 = inlined_call_operand.vmem [shape: f32[4,1,1], index: 2, kind: input, shape index: {}]
  %s3 = inlined_call_operand.hbm [shape: f32[4,4,2048], index: 3, kind: output, shape index: {}]
  %s4 = sld [smem:[#allocation0]]
  $region53: #{tpu_custom_call.1} parent=0
    _
  %s6 = ssub.s32 1, %s4
  %s7 = scalar_select 0, %s6, %s4
  $region1: #{tpu_custom_call.1} parent=0
    #allocation2 [shape = 'u8[131072]{0}', space=vmem, size = 0x20000, scoped, tag = 'input window, operand 0']
    #allocation3 [shape = 's32[2]{0}', space=sflag, size = 0x8, scoped, tag = 'scoped memory for tpu_custom_call.1']
    #allocation4 [shape = 's32[2]{0}', space=sflag, size = 0x8, scoped, tag = 'scoped memory for tpu_custom_call.1']
    #allocation5 [shape = 'u8[32768]{0}', space=vmem, size = 0x8000, scoped, tag = 'input window, operand 1']
    #allocation6 [shape = 's32[2]{0}', space=sflag, size = 0x8, scoped, tag = 'scoped memory for tpu_custom_call.1']
    #allocation7 [shape = 'u8[131072]{0}', space=vmem, size = 0x20000, scoped, tag = 'output window, operand 0']
    %8 = vsyncpa [#allocation3], 0
    %s9 = scalar_lea.sflag [#allocation3], 1
    %10 = vsyncpa %s9, 0
    %11 = vsyncpa [#allocation6], 0
    %s12 = scalar_lea.sflag [#allocation6], 1
    %13 = vsyncpa %s12, 0
    %14 = vsyncpa [#allocation4], 0
    %s15 = scalar_lea.sflag [#allocation4], 1
    %16 = vsyncpa %s15, 0
    loop: start=0, step=1, limit=4
    $region2: #{tpu_custom_call.1} parent=1 // loop_pre_header
      _
    $region3: #{tpu_custom_call.1} parent=1 // loop_header
      %s18 = sphi 0, %s22
      %p19 = scmp.ge.s32.totalorder %s18, 4
      %s28 = sphi 0, %s30
      %s31 = sphi 0, %s28
      %s32 = sphi 0, %s31
      %s48 = sphi 0, %s32
      %s54 = sphi 0, %s56
      %s57 = sphi 0, %s54
      %s58 = sphi 0, %s57
      %s74 = sphi 0, %s58
      %s80 = sphi 0, %s82
      %s83 = sphi 0, %s80
      %s84 = sphi 0, %s83
      %s100 = sphi 0, %s84
      %s106 = sphi 0, %s108
      %s109 = sphi 0, %s106
      %s110 = sphi 0, %s109
      %s126 = sphi 0, %s110
    $region4: #{tpu_custom_call.1} parent=1 // loop_header_branch
      %21 = sbr.rel (%p19) target = $region8
    $region5: #{tpu_custom_call.1} parent=1 // loop_body
      %s23 = ssub.s32 %s18, 1
      %s24 = ssub.s32 %s18, 2
      %s25 = sadd.s32 %s18, 1
      %s26 = ssub.s32 %s18, %s25
      %p27 = scmp.eq.s32.totalorder %s26, 0
      %s29 = sadd.s32 %s28, 1
      %s30 = scalar_select %p27, %s28, %s29
      %p33 = pneg %p27
      %p34 = scmp.eq.s32.totalorder %s18, 1
      %p35 = por %p33, %p34
      %p36 = scmp.ne.s32.totalorder %s28, %s31
      %p37 = scmp.eq.s32.totalorder %s18, 0
      %p38 = por %p36, %p37
      %p39 = scmp.ne.s32.totalorder %s28, %s31
      %p40 = scmp.eq.s32.totalorder %s23, 1
      %p41 = por %p39, %p40
      %p42 = scmp.ne.s32.totalorder %s31, %s32
      %p43 = scmp.eq.s32.totalorder %s23, 0
      %p44 = por %p42, %p43
      %p45 = scmp.ne.s32.totalorder %s31, %s32
      %p46 = scmp.eq.s32.totalorder %s24, 1
      %p47 = por %p45, %p46
      %p49 = scmp.ne.s32.totalorder %s32, %s48
      %p50 = scmp.eq.s32.totalorder %s24, 0
      %p51 = por %p49, %p50
      %s52 = ssub.s32 %s18, %s25
      %p53 = scmp.eq.s32.totalorder %s52, 0
      %s55 = sadd.s32 %s54, 1
      %s56 = scalar_select %p53, %s54, %s55
      %p59 = pneg %p53
      %p60 = scmp.eq.s32.totalorder %s18, 1
      %p61 = por %p59, %p60
      %p62 = scmp.ne.s32.totalorder %s54, %s57
      %p63 = scmp.eq.s32.totalorder %s18, 0
      %p64 = por %p62, %p63
      %p65 = scmp.ne.s32.totalorder %s54, %s57
      %p66 = scmp.eq.s32.totalorder %s23, 1
      %p67 = por %p65, %p66
      %p68 = scmp.ne.s32.totalorder %s57, %s58
      %p69 = scmp.eq.s32.totalorder %s23, 0
      %p70 = por %p68, %p69
      %p71 = scmp.ne.s32.totalorder %s57, %s58
      %p72 = scmp.eq.s32.totalorder %s24, 1
      %p73 = por %p71, %p72
      %p75 = scmp.ne.s32.totalorder %s58, %s74
      %p76 = scmp.eq.s32.totalorder %s24, 0
      %p77 = por %p75, %p76
      %s78 = ssub.s32 %s18, %s25
      %p79 = scmp.eq.s32.totalorder %s78, 0
      %s81 = sadd.s32 %s80, 1
      %s82 = scalar_select %p79, %s80, %s81
      %p85 = pneg %p79
      %p86 = scmp.eq.s32.totalorder %s18, 1
      %p87 = por %p85, %p86
      %p88 = scmp.ne.s32.totalorder %s80, %s83
      %p89 = scmp.eq.s32.totalorder %s18, 0
      %p90 = por %p88, %p89
      %p91 = scmp.ne.s32.totalorder %s80, %s83
      %p92 = scmp.eq.s32.totalorder %s23, 1
      %p93 = por %p91, %p92
      %p94 = scmp.ne.s32.totalorder %s83, %s84
      %p95 = scmp.eq.s32.totalorder %s23, 0
      %p96 = por %p94, %p95
      %p97 = scmp.ne.s32.totalorder %s83, %s84
      %p98 = scmp.eq.s32.totalorder %s24, 1
      %p99 = por %p97, %p98
      %p101 = scmp.ne.s32.totalorder %s84, %s100
      %p102 = scmp.eq.s32.totalorder %s24, 0
      %p103 = por %p101, %p102
      %s104 = ssub.s32 %s18, %s25
      %p105 = scmp.eq.s32.totalorder %s104, 0
      %s107 = sadd.s32 %s106, 1
      %s108 = scalar_select %p105, %s106, %s107
      %p111 = pneg %p105
      %p112 = scmp.eq.s32.totalorder %s18, 1
      %p113 = por %p111, %p112
      %p114 = scmp.ne.s32.totalorder %s106, %s109
      %p115 = scmp.eq.s32.totalorder %s18, 0
      %p116 = por %p114, %p115
      %p117 = scmp.ne.s32.totalorder %s106, %s109
      %p118 = scmp.eq.s32.totalorder %s23, 1
      %p119 = por %p117, %p118
      %p120 = scmp.ne.s32.totalorder %s109, %s110
      %p121 = scmp.eq.s32.totalorder %s23, 0
      %p122 = por %p120, %p121
      %p123 = scmp.ne.s32.totalorder %s109, %s110
      %p124 = scmp.eq.s32.totalorder %s24, 1
      %p125 = por %p123, %p124
      %p127 = scmp.ne.s32.totalorder %s110, %s126
      %p128 = scmp.eq.s32.totalorder %s24, 0
      %p129 = por %p127, %p128
      %p130 = scmp.le.s32.totalorder 1, %s18
      %p131 = scmp.lt.s32.totalorder %s18, 3
      %p132 = pnand %p130, %p131
      %p133 = pneg %p132
      // Predicated region
      $region9: #{tpu_custom_call.1} parent=5 // pred_check
        _
      $region10: #{tpu_custom_call.1} parent=5 // pred_check_branch
        %135 = sbr.rel (%p132) target = $region12
      $region11: #{tpu_custom_call.1} parent=5 // pred_region
        %s136 = ssub.s32 %s18, 1
      $region12: #{tpu_custom_call.1} parent=5 // pred_fallthru
        _
      %p137 = scmp.lt.s32.totalorder %s18, 2
      // Predicated region
      $region13: #{tpu_custom_call.1} parent=5 // pred_check
        %p138 = pneg %p137
      $region14: #{tpu_custom_call.1} parent=5 // pred_check_branch
        %140 = sbr.rel (%p138) target = $region16
      $region15: #{tpu_custom_call.1} parent=5 // pred_region
        // Predicated region
        $region17: #{tpu_custom_call.1} parent=15 // pred_check
          %p141 = pneg %p38
        $region18: #{tpu_custom_call.1} parent=15 // pred_check_branch
          %143 = sbr.rel (%p141) target = $region20
        $region19: #{tpu_custom_call.1} parent=15 // pred_region
          %s144 = sand.u32 %s28, 1
          %s145 = scalar_lea.sflag [#allocation3], %s144
          %s146 = sand.u32 %s28, 1
          %s147 = smul.addr %s146, 128
          %s148 = scalar_lea.vmem [#allocation2], %s147
          %s149 = smul.u32 2, %s18
          %s151 = ssub.s32 2048, 2048
          %152 = vsyncadd %s145, %s151
          %s153 = smul.addr %s149, 16
          %s154 = smul.addr %s153, 64
          %s155 = scalar_lea.hbm %s0, %s154
          %s156 = sshll.u32 %s148, 4
          %s157 = int_to_ptr.vmem [resolvable:$true] %s156
          %162 = dma.hbm_to_vmem [thread:$0]  %s155, 2048, %s157, %s145, 1024, 1024, 64
        $region20: #{tpu_custom_call.1} parent=15 // pred_fallthru
          _
        // Predicated region
        $region21: #{tpu_custom_call.1} parent=15 // pred_check
          %p163 = pneg %p64
        $region22: #{tpu_custom_call.1} parent=15 // pred_check_branch
          %165 = sbr.rel (%p163) target = $region24
        $region23: #{tpu_custom_call.1} parent=15 // pred_region
          %s166 = sand.u32 %s54, 1
          %s167 = scalar_lea.sflag [#allocation6], %s166
          %s168 = sand.u32 %s54, 1
          %s169 = smul.addr %s168, 32
          %s170 = scalar_lea.vmem [#allocation5], %s169
          %s171 = smul.u32 2, %s18
          %s173 = ssub.s32 512, 512
          %174 = vsyncadd %s167, %s173
          %s175 = smul.addr %s171, 16
          %s176 = smul.addr %s175, 16
          %s177 = scalar_lea.hbm %s1, %s176
          %s178 = sshll.u32 %s170, 4
          %s179 = int_to_ptr.vmem [resolvable:$true] %s178
          %184 = dma.hbm_to_vmem [thread:$0]  %s177, 512, %s179, %s167, 256, 256, 16
        $region24: #{tpu_custom_call.1} parent=15 // pred_fallthru
          _
        // Predicated region
        $region25: #{tpu_custom_call.1} parent=15 // pred_check
          %p185 = pneg %p90
        $region26: #{tpu_custom_call.1} parent=15 // pred_check_branch
          %187 = sbr.rel (%p185) target = $region28
        $region27: #{tpu_custom_call.1} parent=15 // pred_region
          %s188 = smul.u32 2, %s18
          %p189 = scmp.lt.s32.totalorder %s188, 3
          %s190 = scalar_select %p189, %s188, 3
          %s191 = scalar_lea.vmem %s2, %s190
          %s192 = smul.u32 2, %s18
        $region28: #{tpu_custom_call.1} parent=15 // pred_fallthru
          _
      $region16: #{tpu_custom_call.1} parent=5 // pred_fallthru
        _
      %p193 = scmp.le.s32.totalorder 1, %s18
      %p194 = scmp.lt.s32.totalorder %s18, 3
      %p195 = pnand %p193, %p194
      %p196 = pneg %p195
      // Predicated region
      $region29: #{tpu_custom_call.1} parent=5 // pred_check
        _
      $region30: #{tpu_custom_call.1} parent=5 // pred_check_branch
        %198 = sbr.rel (%p195) target = $region32
      $region31: #{tpu_custom_call.1} parent=5 // pred_region
        %s199 = ssub.s32 %s18, 1
        %s200 = sand.u32 %s31, 1
        %s201 = scalar_lea.sflag [#allocation3], %s200
        %s202 = sand.u32 %s31, 1
        %s203 = smul.addr %s202, 128
        %s204 = scalar_lea.vmem [#allocation2], %s203
        // Predicated region
        $region33: #{tpu_custom_call.1} parent=31 // pred_check
          %p205 = pneg %p44
        $region34: #{tpu_custom_call.1} parent=31 // pred_check_branch
          %207 = sbr.rel (%p205) target = $region36
        $region35: #{tpu_custom_call.1} parent=31 // pred_region
          %208 = dma.done %s201, 2048
        $region36: #{tpu_custom_call.1} parent=31 // pred_fallthru
          _
        %s209 = sand.u32 %s57, 1
        %s210 = scalar_lea.sflag [#allocation6], %s209
        %s211 = sand.u32 %s57, 1
        %s212 = smul.addr %s211, 32
        %s213 = scalar_lea.vmem [#allocation5], %s212
        // Predicated region
        $region37: #{tpu_custom_call.1} parent=31 // pred_check
          %p214 = pneg %p70
        $region38: #{tpu_custom_call.1} parent=31 // pred_check_branch
          %216 = sbr.rel (%p214) target = $region40
        $region39: #{tpu_custom_call.1} parent=31 // pred_region
          %217 = dma.done %s210, 512
        $region40: #{tpu_custom_call.1} parent=31 // pred_fallthru
          _
        %s218 = sand.u32 %s31, 1
        %s219 = scalar_lea.sflag [#allocation3], %s218
        %s220 = sand.u32 %s31, 1
        %s221 = smul.addr %s220, 128
        %s222 = scalar_lea.vmem [#allocation2], %s221
        %p223 = pneg %p44
        %p224 = pneg %p41
        %s225 = sand.u32 %s57, 1
        %s226 = scalar_lea.sflag [#allocation6], %s225
        %s227 = sand.u32 %s57, 1
        %s228 = smul.addr %s227, 32
        %s229 = scalar_lea.vmem [#allocation5], %s228
        %p230 = pneg %p70
        %p231 = pneg %p67
        %s232 = smul.u32 2, %s23
        %p233 = scmp.lt.s32.totalorder %s232, 3
        %s234 = scalar_select %p233, %s232, 3
        %s235 = scalar_lea.vmem %s2, %s234
        %p236 = pneg %p96
        %p237 = pneg %p93
        %p238 = pneg %p122
        %p239 = pneg %p119
        %s240 = sand.u32 %s109, 1
        %s241 = scalar_lea.sflag [#allocation4], %s240
        %s242 = sand.u32 %s109, 1
        %s243 = smul.addr %s242, 128
        %s244 = scalar_lea.vmem [#allocation7], %s243
        %s245 = smul.u32 2, %s23
        %s246 = smul.u32 2, %s23
        %s247 = smul.u32 2, %s23
        %p248 = scmp.lt.s32.totalorder %s247, 3
        %s249 = scalar_select %p248, %s247, 3
        %s250 = scalar_lea.vmem %s2, %s249
        %s251 = smul.u32 2, %s23
        %s252 = smul.u32 2, %s23
        %v253 = vld [vmem:[%s204] sm:$0xff]
        %v254 = vld [vmem:[%s204 + $0x8] sm:$0xff]
        %v255 = vld [vmem:[%s204 + $0x10] sm:$0xff]
        %v256 = vld [vmem:[%s204 + $0x18] sm:$0xff]
        %v257 = vld [vmem:[%s204 + $0x20] sm:$0xff]
        %v258 = vld [vmem:[%s204 + $0x28] sm:$0xff]
        %v259 = vld [vmem:[%s204 + $0x30] sm:$0xff]
        %v260 = vld [vmem:[%s204 + $0x38] sm:$0xff]
        %v261 = vld [vmem:[%s204 + $0x40] sm:$0xff]
        %v262 = vld [vmem:[%s204 + $0x48] sm:$0xff]
        %v263 = vld [vmem:[%s204 + $0x50] sm:$0xff]
        %v264 = vld [vmem:[%s204 + $0x58] sm:$0xff]
        %v265 = vld [vmem:[%s204 + $0x60] sm:$0xff]
        %v266 = vld [vmem:[%s204 + $0x68] sm:$0xff]
        %v267 = vld [vmem:[%s204 + $0x70] sm:$0xff]
        %v268 = vld [vmem:[%s204 + $0x78] sm:$0xff]
        %v269 = vld [vmem:[%s213] sm:$0xff]
        %v270 = vld [vmem:[%s213 + $0x8] sm:$0xff]
        %v271 = vld [vmem:[%s213 + $0x10] sm:$0xff]
        %v272 = vld [vmem:[%s213 + $0x18] sm:$0xff]
        %v273 = vmul.f32 %v253, %v253
        %v274 = vmul.f32 %v254, %v254
        %v275 = vmul.f32 %v255, %v255
        %v276 = vmul.f32 %v256, %v256
        %v277 = vmul.f32 %v257, %v257
        %v278 = vmul.f32 %v258, %v258
        %v279 = vmul.f32 %v259, %v259
        %v280 = vmul.f32 %v260, %v260
        %v281 = vmul.f32 %v261, %v261
        %v282 = vmul.f32 %v262, %v262
        %v283 = vmul.f32 %v263, %v263
        %v284 = vmul.f32 %v264, %v264
        %v285 = vmul.f32 %v265, %v265
        %v286 = vmul.f32 %v266, %v266
        %v287 = vmul.f32 %v267, %v267
        %v288 = vmul.f32 %v268, %v268
        %v305 = vcombine.high %v273, %v273
        %v306 = vcombine.high %v274, %v274
        %v307 = vcombine.high %v275, %v275
        %v308 = vcombine.high %v276, %v276
        %v309 = vcombine.high %v277, %v277
        %v310 = vcombine.high %v278, %v278
        %v311 = vcombine.high %v279, %v279
        %v312 = vcombine.high %v280, %v280
        %v313 = vcombine.high %v281, %v281
        %v314 = vcombine.high %v282, %v282
        %v315 = vcombine.high %v283, %v283
        %v316 = vcombine.high %v284, %v284
        %v317 = vcombine.high %v285, %v285
        %v318 = vcombine.high %v286, %v286
        %v319 = vcombine.high %v287, %v287
        %v320 = vcombine.high %v288, %v288
        %vm337 = vcmask 1043456
        %v338 = vsel %vm337, %v273, 0.0
        %v339 = vsel %vm337, %v305, 0.0
        %v340 = vadd.f32 %v338, %v339
        %v341 = vsel %vm337, %v274, 0.0
        %v342 = vadd.f32 %v340, %v341
        %v343 = vsel %vm337, %v306, 0.0
        %v344 = vadd.f32 %v342, %v343
        %v345 = vsel %vm337, %v275, 0.0
        %v346 = vadd.f32 %v344, %v345
        %v347 = vsel %vm337, %v307, 0.0
        %v348 = vadd.f32 %v346, %v347
        %v349 = vsel %vm337, %v276, 0.0
        %v350 = vadd.f32 %v348, %v349
        %v351 = vsel %vm337, %v308, 0.0
        %v352 = vadd.f32 %v350, %v351
        %v353 = vsel %vm337, %v277, 0.0
        %v354 = vadd.f32 %v352, %v353
        %v355 = vsel %vm337, %v309, 0.0
        %v356 = vadd.f32 %v354, %v355
        %v357 = vsel %vm337, %v278, 0.0
        %v358 = vadd.f32 %v356, %v357
        %v359 = vsel %vm337, %v310, 0.0
        %v360 = vadd.f32 %v358, %v359
        %v361 = vsel %vm337, %v279, 0.0
        %v362 = vadd.f32 %v360, %v361
        %v363 = vsel %vm337, %v311, 0.0
        %v364 = vadd.f32 %v362, %v363
        %v365 = vsel %vm337, %v280, 0.0
        %v366 = vadd.f32 %v364, %v365
        %v367 = vsel %vm337, %v312, 0.0
        %v368 = vadd.f32 %v366, %v367
        %369 = vadd.xlane.f32.xlu0 %v368
        %v370 = vpop.xlane.xlu0 %369
        %v371 = vsel %vm337, %v281, 0.0
        %v372 = vsel %vm337, %v313, 0.0
        %v373 = vadd.f32 %v371, %v372
        %v374 = vsel %vm337, %v282, 0.0
        %v375 = vadd.f32 %v373, %v374
        %v376 = vsel %vm337, %v314, 0.0
        %v377 = vadd.f32 %v375, %v376
        %v378 = vsel %vm337, %v283, 0.0
        %v379 = vadd.f32 %v377, %v378
        %v380 = vsel %vm337, %v315, 0.0
        %v381 = vadd.f32 %v379, %v380
        %v382 = vsel %vm337, %v284, 0.0
        %v383 = vadd.f32 %v381, %v382
        %v384 = vsel %vm337, %v316, 0.0
        %v385 = vadd.f32 %v383, %v384
        %v386 = vsel %vm337, %v285, 0.0
        %v387 = vadd.f32 %v385, %v386
        %v388 = vsel %vm337, %v317, 0.0
        %v389 = vadd.f32 %v387, %v388
        %v390 = vsel %vm337, %v286, 0.0
        %v391 = vadd.f32 %v389, %v390
        %v392 = vsel %vm337, %v318, 0.0
        %v393 = vadd.f32 %v391, %v392
        %v394 = vsel %vm337, %v287, 0.0
        %v395 = vadd.f32 %v393, %v394
        %v396 = vsel %vm337, %v319, 0.0
        %v397 = vadd.f32 %v395, %v396
        %v398 = vsel %vm337, %v288, 0.0
        %v399 = vadd.f32 %v397, %v398
        %v400 = vsel %vm337, %v320, 0.0
        %v401 = vadd.f32 %v399, %v400
        %402 = vadd.xlane.f32.xlu0 %v401
        %v403 = vpop.xlane.xlu0 %402
        %v404 = vrcp.pop 2048.0
        %v405 = vmul.f32 %v370, %v404
        %v406 = vmul.f32 %v403, %v404
        %v407 = vrsqrt.pop %v405
        %v408 = vmul.f32 %v405, %v407
        %vm409 = vcmp.eq.f32.partialorder %v405, inf
        %v410 = vsel %vm409, %v405, %v408
        %vm411 = vcmp.eq.f32.partialorder %v405, 0.0
        %v412 = vand.u32 %v405, 2147483648
        %v413 = vsel %vm411, %v412, %v410
        %v414 = vrsqrt.pop %v406
        %v415 = vmul.f32 %v406, %v414
        %vm416 = vcmp.eq.f32.partialorder %v406, inf
        %v417 = vsel %vm416, %v406, %v415
        %vm418 = vcmp.eq.f32.partialorder %v406, 0.0
        %v419 = vand.u32 %v406, 2147483648
        %v420 = vsel %vm418, %v419, %v417
        %v421 = vmul.f32 %v269, %v269
        %v422 = vmul.f32 %v270, %v270
        %v423 = vmul.f32 %v271, %v271
        %v424 = vmul.f32 %v272, %v272
        %v429 = vlaneseq
        %v430 = vshrl.u32 %v429, 7
        %v431 = vsub.s32 0, %v430
        %v432 = vrot.slane %v421, %v431
        %v433 = vlaneseq
        %v434 = vshrl.u32 %v433, 7
        %v435 = vsub.s32 1, %v434
        %v436 = vrot.slane %v421, %v435
        %v437 = vlaneseq
        %v438 = vshrl.u32 %v437, 7
        %v439 = vsub.s32 2, %v438
        %v440 = vrot.slane %v421, %v439
        %v441 = vlaneseq
        %v442 = vshrl.u32 %v441, 7
        %v443 = vsub.s32 3, %v442
        %v444 = vrot.slane %v421, %v443
        %v445 = vlaneseq
        %v446 = vshrl.u32 %v445, 7
        %v447 = vsub.s32 4, %v446
        %v448 = vrot.slane %v421, %v447
        %v449 = vlaneseq
        %v450 = vshrl.u32 %v449, 7
        %v451 = vsub.s32 5, %v450
        %v452 = vrot.slane %v421, %v451
        %v453 = vlaneseq
        %v454 = vshrl.u32 %v453, 7
        %v455 = vsub.s32 6, %v454
        %v456 = vrot.slane %v421, %v455
        %v457 = vlaneseq
        %v458 = vshrl.u32 %v457, 7
        %v459 = vsub.s32 7, %v458
        %v460 = vrot.slane %v421, %v459
        %v461 = vlaneseq
        %v462 = vshrl.u32 %v461, 7
        %v463 = vsub.s32 0, %v462
        %v464 = vrot.slane %v422, %v463
        %v465 = vlaneseq
        %v466 = vshrl.u32 %v465, 7
        %v467 = vsub.s32 1, %v466
        %v468 = vrot.slane %v422, %v467
        %v469 = vlaneseq
        %v470 = vshrl.u32 %v469, 7
        %v471 = vsub.s32 2, %v470
        %v472 = vrot.slane %v422, %v471
        %v473 = vlaneseq
        %v474 = vshrl.u32 %v473, 7
        %v475 = vsub.s32 3, %v474
        %v476 = vrot.slane %v422, %v475
        %v477 = vlaneseq
        %v478 = vshrl.u32 %v477, 7
        %v479 = vsub.s32 4, %v478
        %v480 = vrot.slane %v422, %v479
        %v481 = vlaneseq
        %v482 = vshrl.u32 %v481, 7
        %v483 = vsub.s32 5, %v482
        %v484 = vrot.slane %v422, %v483
        %v485 = vlaneseq
        %v486 = vshrl.u32 %v485, 7
        %v487 = vsub.s32 6, %v486
        %v488 = vrot.slane %v422, %v487
        %v489 = vlaneseq
        %v490 = vshrl.u32 %v489, 7
        %v491 = vsub.s32 7, %v490
        %v492 = vrot.slane %v422, %v491
        %v493 = vlaneseq
        %v494 = vshrl.u32 %v493, 7
        %v495 = vsub.s32 0, %v494
        %v496 = vrot.slane %v423, %v495
        %v497 = vlaneseq
        %v498 = vshrl.u32 %v497, 7
        %v499 = vsub.s32 1, %v498
        %v500 = vrot.slane %v423, %v499
        %v501 = vlaneseq
        %v502 = vshrl.u32 %v501, 7
        %v503 = vsub.s32 2, %v502
        %v504 = vrot.slane %v423, %v503
        %v505 = vlaneseq
        %v506 = vshrl.u32 %v505, 7
        %v507 = vsub.s32 3, %v506
        %v508 = vrot.slane %v423, %v507
        %v509 = vlaneseq
        %v510 = vshrl.u32 %v509, 7
        %v511 = vsub.s32 4, %v510
        %v512 = vrot.slane %v423, %v511
        %v513 = vlaneseq
        %v514 = vshrl.u32 %v513, 7
        %v515 = vsub.s32 5, %v514
        %v516 = vrot.slane %v423, %v515
        %v517 = vlaneseq
        %v518 = vshrl.u32 %v517, 7
        %v519 = vsub.s32 6, %v518
        %v520 = vrot.slane %v423, %v519
        %v521 = vlaneseq
        %v522 = vshrl.u32 %v521, 7
        %v523 = vsub.s32 7, %v522
        %v524 = vrot.slane %v423, %v523
        %v525 = vlaneseq
        %v526 = vshrl.u32 %v525, 7
        %v527 = vsub.s32 0, %v526
        %v528 = vrot.slane %v424, %v527
        %v529 = vlaneseq
        %v530 = vshrl.u32 %v529, 7
        %v531 = vsub.s32 1, %v530
        %v532 = vrot.slane %v424, %v531
        %v533 = vlaneseq
        %v534 = vshrl.u32 %v533, 7
        %v535 = vsub.s32 2, %v534
        %v536 = vrot.slane %v424, %v535
        %v537 = vlaneseq
        %v538 = vshrl.u32 %v537, 7
        %v539 = vsub.s32 3, %v538
        %v540 = vrot.slane %v424, %v539
        %v541 = vlaneseq
        %v542 = vshrl.u32 %v541, 7
        %v543 = vsub.s32 4, %v542
        %v544 = vrot.slane %v424, %v543
        %v545 = vlaneseq
        %v546 = vshrl.u32 %v545, 7
        %v547 = vsub.s32 5, %v546
        %v548 = vrot.slane %v424, %v547
        %v549 = vlaneseq
        %v550 = vshrl.u32 %v549, 7
        %v551 = vsub.s32 6, %v550
        %v552 = vrot.slane %v424, %v551
        %v553 = vlaneseq
        %v554 = vshrl.u32 %v553, 7
        %v555 = vsub.s32 7, %v554
        %v556 = vrot.slane %v424, %v555
        %vm589 = vcmask 1040384
        %v590 = vsel %vm589, %v432, 0.0
        %v591 = vsel %vm589, %v436, 0.0
        %v592 = vadd.f32 %v590, %v591
        %v593 = vsel %vm589, %v440, 0.0
        %v594 = vadd.f32 %v592, %v593
        %v595 = vsel %vm589, %v444, 0.0
        %v596 = vadd.f32 %v594, %v595
        %v597 = vsel %vm589, %v448, 0.0
        %v598 = vadd.f32 %v596, %v597
        %v599 = vsel %vm589, %v452, 0.0
        %v600 = vadd.f32 %v598, %v599
        %v601 = vsel %vm589, %v456, 0.0
        %v602 = vadd.f32 %v600, %v601
        %v603 = vsel %vm589, %v460, 0.0
        %v604 = vadd.f32 %v602, %v603
        %v605 = vsel %vm589, %v464, 0.0
        %v606 = vadd.f32 %v604, %v605
        %v607 = vsel %vm589, %v468, 0.0
        %v608 = vadd.f32 %v606, %v607
        %v609 = vsel %vm589, %v472, 0.0
        %v610 = vadd.f32 %v608, %v609
        %v611 = vsel %vm589, %v476, 0.0
        %v612 = vadd.f32 %v610, %v611
        %v613 = vsel %vm589, %v480, 0.0
        %v614 = vadd.f32 %v612, %v613
        %v615 = vsel %vm589, %v484, 0.0
        %v616 = vadd.f32 %v614, %v615
        %v617 = vsel %vm589, %v488, 0.0
        %v618 = vadd.f32 %v616, %v617
        %v619 = vsel %vm589, %v492, 0.0
        %v620 = vadd.f32 %v618, %v619
        %621 = vadd.xlane.f32.xlu0 %v620
        %v622 = vpop.xlane.xlu0 %621
        %v623 = vsel %vm589, %v496, 0.0
        %v624 = vsel %vm589, %v500, 0.0
        %v625 = vadd.f32 %v623, %v624
        %v626 = vsel %vm589, %v504, 0.0
        %v627 = vadd.f32 %v625, %v626
        %v628 = vsel %vm589, %v508, 0.0
        %v629 = vadd.f32 %v627, %v628
        %v630 = vsel %vm589, %v512, 0.0
        %v631 = vadd.f32 %v629, %v630
        %v632 = vsel %vm589, %v516, 0.0
        %v633 = vadd.f32 %v631, %v632
        %v634 = vsel %vm589, %v520, 0.0
        %v635 = vadd.f32 %v633, %v634
        %v636 = vsel %vm589, %v524, 0.0
        %v637 = vadd.f32 %v635, %v636
        %v638 = vsel %vm589, %v528, 0.0
        %v639 = vadd.f32 %v637, %v638
        %v640 = vsel %vm589, %v532, 0.0
        %v641 = vadd.f32 %v639, %v640
        %v642 = vsel %vm589, %v536, 0.0
        %v643 = vadd.f32 %v641, %v642
        %v644 = vsel %vm589, %v540, 0.0
        %v645 = vadd.f32 %v643, %v644
        %v646 = vsel %vm589, %v544, 0.0
        %v647 = vadd.f32 %v645, %v646
        %v648 = vsel %vm589, %v548, 0.0
        %v649 = vadd.f32 %v647, %v648
        %v650 = vsel %vm589, %v552, 0.0
        %v651 = vadd.f32 %v649, %v650
        %v652 = vsel %vm589, %v556, 0.0
        %v653 = vadd.f32 %v651, %v652
        %654 = vadd.xlane.f32.xlu0 %v653
        %v655 = vpop.xlane.xlu0 %654
        %v656 = vmul.f32 %v622, %v404
        %v657 = vmul.f32 %v655, %v404
        %v658 = vadd.f32 %v656, 1e-16
        %v659 = vadd.f32 %v657, 1e-16
        %v660 = vrsqrt.pop %v658
        %v661 = vrsqrt.pop %v659
        %v664 = vlaneseq
        %v665 = vshrl.u32 %v664, 7
        %v666 = vsub.s32 0, %v665
        %v667 = vrot.slane %v660, %v666
        %v668 = vlaneseq
        %v669 = vshrl.u32 %v668, 7
        %v670 = vsub.s32 0, %v669
        %v671 = vrot.slane %v661, %v670
        %v674 = vmul.f32 %v269, %v667
        %v675 = vmul.f32 %v270, %v667
        %v676 = vmul.f32 %v271, %v671
        %v677 = vmul.f32 %v272, %v671
        %v678 = vld [vmem:[%s250] sm:$0x1]
        %v679 = vld [vmem:[%s250 + $0x1] sm:$0x1]
        %v682 = vlaneseq
        %v683 = vshrl.u32 %v682, 7
        %v684 = vsub.s32 0, %v683
        %v685 = vrot.slane %v678, %v684
        %v686 = vlaneseq
        %v687 = vshrl.u32 %v686, 7
        %v688 = vsub.s32 0, %v687
        %v689 = vrot.slane %v679, %v688
        %v692 = vmul.f32 %v413, %v685
        %v693 = vmul.f32 %v420, %v689
        %695 = vset.pattern.permute.xlu0 0
        %696 = vperm.xlu0 %695, %v692
        %v697 = vpop.permute.xlu0 %696
        %700 = vset.pattern.permute.xlu0 0
        %701 = vperm.xlu0 %700, %v693
        %v702 = vpop.permute.xlu0 %701
        %v708 = vlaneseq
        %v709 = vshrl.u32 %v708, 7
        %v710 = vsub.s32 0, %v709
        %v711 = vrot.slane %v674, %v710
        %v712 = vlaneseq
        %v713 = vshrl.u32 %v712, 7
        %v714 = vsub.s32 1, %v713
        %v715 = vrot.slane %v674, %v714
        %v716 = vlaneseq
        %v717 = vshrl.u32 %v716, 7
        %v718 = vsub.s32 2, %v717
        %v719 = vrot.slane %v674, %v718
        %v720 = vlaneseq
        %v721 = vshrl.u32 %v720, 7
        %v722 = vsub.s32 3, %v721
        %v723 = vrot.slane %v674, %v722
        %v724 = vlaneseq
        %v725 = vshrl.u32 %v724, 7
        %v726 = vsub.s32 4, %v725
        %v727 = vrot.slane %v674, %v726
        %v728 = vlaneseq
        %v729 = vshrl.u32 %v728, 7
        %v730 = vsub.s32 5, %v729
        %v731 = vrot.slane %v674, %v730
        %v732 = vlaneseq
        %v733 = vshrl.u32 %v732, 7
        %v734 = vsub.s32 6, %v733
        %v735 = vrot.slane %v674, %v734
        %v736 = vlaneseq
        %v737 = vshrl.u32 %v736, 7
        %v738 = vsub.s32 7, %v737
        %v739 = vrot.slane %v674, %v738
        %v740 = vlaneseq
        %v741 = vshrl.u32 %v740, 7
        %v742 = vsub.s32 0, %v741
        %v743 = vrot.slane %v675, %v742
        %v744 = vlaneseq
        %v745 = vshrl.u32 %v744, 7
        %v746 = vsub.s32 1, %v745
        %v747 = vrot.slane %v675, %v746
        %v748 = vlaneseq
        %v749 = vshrl.u32 %v748, 7
        %v750 = vsub.s32 2, %v749
        %v751 = vrot.slane %v675, %v750
        %v752 = vlaneseq
        %v753 = vshrl.u32 %v752, 7
        %v754 = vsub.s32 3, %v753
        %v755 = vrot.slane %v675, %v754
        %v756 = vlaneseq
        %v757 = vshrl.u32 %v756, 7
        %v758 = vsub.s32 4, %v757
        %v759 = vrot.slane %v675, %v758
        %v760 = vlaneseq
        %v761 = vshrl.u32 %v760, 7
        %v762 = vsub.s32 5, %v761
        %v763 = vrot.slane %v675, %v762
        %v764 = vlaneseq
        %v765 = vshrl.u32 %v764, 7
        %v766 = vsub.s32 6, %v765
        %v767 = vrot.slane %v675, %v766
        %v768 = vlaneseq
        %v769 = vshrl.u32 %v768, 7
        %v770 = vsub.s32 7, %v769
        %v771 = vrot.slane %v675, %v770
        %v772 = vlaneseq
        %v773 = vshrl.u32 %v772, 7
        %v774 = vsub.s32 0, %v773
        %v775 = vrot.slane %v676, %v774
        %v776 = vlaneseq
        %v777 = vshrl.u32 %v776, 7
        %v778 = vsub.s32 1, %v777
        %v779 = vrot.slane %v676, %v778
        %v780 = vlaneseq
        %v781 = vshrl.u32 %v780, 7
        %v782 = vsub.s32 2, %v781
        %v783 = vrot.slane %v676, %v782
        %v784 = vlaneseq
        %v785 = vshrl.u32 %v784, 7
        %v786 = vsub.s32 3, %v785
        %v787 = vrot.slane %v676, %v786
        %v788 = vlaneseq
        %v789 = vshrl.u32 %v788, 7
        %v790 = vsub.s32 4, %v789
        %v791 = vrot.slane %v676, %v790
        %v792 = vlaneseq
        %v793 = vshrl.u32 %v792, 7
        %v794 = vsub.s32 5, %v793
        %v795 = vrot.slane %v676, %v794
        %v796 = vlaneseq
        %v797 = vshrl.u32 %v796, 7
        %v798 = vsub.s32 6, %v797
        %v799 = vrot.slane %v676, %v798
        %v800 = vlaneseq
        %v801 = vshrl.u32 %v800, 7
        %v802 = vsub.s32 7, %v801
        %v803 = vrot.slane %v676, %v802
        %v804 = vlaneseq
        %v805 = vshrl.u32 %v804, 7
        %v806 = vsub.s32 0, %v805
        %v807 = vrot.slane %v677, %v806
        %v808 = vlaneseq
        %v809 = vshrl.u32 %v808, 7
        %v810 = vsub.s32 1, %v809
        %v811 = vrot.slane %v677, %v810
        %v812 = vlaneseq
        %v813 = vshrl.u32 %v812, 7
        %v814 = vsub.s32 2, %v813
        %v815 = vrot.slane %v677, %v814
        %v816 = vlaneseq
        %v817 = vshrl.u32 %v816, 7
        %v818 = vsub.s32 3, %v817
        %v819 = vrot.slane %v677, %v818
        %v820 = vlaneseq
        %v821 = vshrl.u32 %v820, 7
        %v822 = vsub.s32 4, %v821
        %v823 = vrot.slane %v677, %v822
        %v824 = vlaneseq
        %v825 = vshrl.u32 %v824, 7
        %v826 = vsub.s32 5, %v825
        %v827 = vrot.slane %v677, %v826
        %v828 = vlaneseq
        %v829 = vshrl.u32 %v828, 7
        %v830 = vsub.s32 6, %v829
        %v831 = vrot.slane %v677, %v830
        %v832 = vlaneseq
        %v833 = vshrl.u32 %v832, 7
        %v834 = vsub.s32 7, %v833
        %v835 = vrot.slane %v677, %v834
        %v868 = vmul.f32 %v697, %v711
        %v869 = vmul.f32 %v697, %v715
        %v870 = vmul.f32 %v697, %v719
        %v871 = vmul.f32 %v697, %v723
        %v872 = vmul.f32 %v697, %v727
        %v873 = vmul.f32 %v697, %v731
        %v874 = vmul.f32 %v697, %v735
        %v875 = vmul.f32 %v697, %v739
        %v876 = vmul.f32 %v697, %v743
        %v877 = vmul.f32 %v697, %v747
        %v878 = vmul.f32 %v697, %v751
        %v879 = vmul.f32 %v697, %v755
        %v880 = vmul.f32 %v697, %v759
        %v881 = vmul.f32 %v697, %v763
        %v882 = vmul.f32 %v697, %v767
        %v883 = vmul.f32 %v697, %v771
        %v884 = vmul.f32 %v702, %v775
        %v885 = vmul.f32 %v702, %v779
        %v886 = vmul.f32 %v702, %v783
        %v887 = vmul.f32 %v702, %v787
        %v888 = vmul.f32 %v702, %v791
        %v889 = vmul.f32 %v702, %v795
        %v890 = vmul.f32 %v702, %v799
        %v891 = vmul.f32 %v702, %v803
        %v892 = vmul.f32 %v702, %v807
        %v893 = vmul.f32 %v702, %v811
        %v894 = vmul.f32 %v702, %v815
        %v895 = vmul.f32 %v702, %v819
        %v896 = vmul.f32 %v702, %v823
        %v897 = vmul.f32 %v702, %v827
        %v898 = vmul.f32 %v702, %v831
        %v899 = vmul.f32 %v702, %v835
        %v932 = vcombine.low %v868, %v869
        %v933 = vcombine.low %v870, %v871
        %v934 = vcombine.low %v872, %v873
        %v935 = vcombine.low %v874, %v875
        %v936 = vcombine.low %v876, %v877
        %v937 = vcombine.low %v878, %v879
        %v938 = vcombine.low %v880, %v881
        %v939 = vcombine.low %v882, %v883
        %v940 = vcombine.low %v884, %v885
        %v941 = vcombine.low %v886, %v887
        %v942 = vcombine.low %v888, %v889
        %v943 = vcombine.low %v890, %v891
        %v944 = vcombine.low %v892, %v893
        %v945 = vcombine.low %v894, %v895
        %v946 = vcombine.low %v896, %v897
        %v947 = vcombine.low %v898, %v899
        %v964 = vadd.f32 %v253, %v932
        %v965 = vadd.f32 %v254, %v933
        %v966 = vadd.f32 %v255, %v934
        %v967 = vadd.f32 %v256, %v935
        %v968 = vadd.f32 %v257, %v936
        %v969 = vadd.f32 %v258, %v937
        %v970 = vadd.f32 %v259, %v938
        %v971 = vadd.f32 %v260, %v939
        %v972 = vadd.f32 %v261, %v940
        %v973 = vadd.f32 %v262, %v941
        %v974 = vadd.f32 %v263, %v942
        %v975 = vadd.f32 %v264, %v943
        %v976 = vadd.f32 %v265, %v944
        %v977 = vadd.f32 %v266, %v945
        %v978 = vadd.f32 %v267, %v946
        %v979 = vadd.f32 %v268, %v947
        %980 = vst [vmem:[%s244] sm:$0xff] %v964
        %981 = vst [vmem:[%s244 + $0x8] sm:$0xff] %v965
        %982 = vst [vmem:[%s244 + $0x10] sm:$0xff] %v966
        %983 = vst [vmem:[%s244 + $0x18] sm:$0xff] %v967
        %984 = vst [vmem:[%s244 + $0x20] sm:$0xff] %v968
        %985 = vst [vmem:[%s244 + $0x28] sm:$0xff] %v969
        %986 = vst [vmem:[%s244 + $0x30] sm:$0xff] %v970
        %987 = vst [vmem:[%s244 + $0x38] sm:$0xff] %v971
        %988 = vst [vmem:[%s244 + $0x40] sm:$0xff] %v972
        %989 = vst [vmem:[%s244 + $0x48] sm:$0xff] %v973
        %990 = vst [vmem:[%s244 + $0x50] sm:$0xff] %v974
        %991 = vst [vmem:[%s244 + $0x58] sm:$0xff] %v975
        %992 = vst [vmem:[%s244 + $0x60] sm:$0xff] %v976
        %993 = vst [vmem:[%s244 + $0x68] sm:$0xff] %v977
        %994 = vst [vmem:[%s244 + $0x70] sm:$0xff] %v978
        %995 = vst [vmem:[%s244 + $0x78] sm:$0xff] %v979
        %s996 = sand.u32 %s109, 1
        %s997 = scalar_lea.sflag [#allocation4], %s996
        %s998 = sand.u32 %s109, 1
        %s999 = smul.addr %s998, 128
        %s1000 = scalar_lea.vmem [#allocation7], %s999
        // Predicated region
        $region41: #{tpu_custom_call.1} parent=31 // pred_check
          %p1001 = pneg %p119
        $region42: #{tpu_custom_call.1} parent=31 // pred_check_branch
          %1003 = sbr.rel (%p1001) target = $region44
        $region43: #{tpu_custom_call.1} parent=31 // pred_region
          %s1004 = smul.u32 2, %s23
          %s1006 = ssub.s32 2048, 2048
          %1007 = vsyncadd %s997, %s1006
          %s1008 = smul.addr %s1004, 16
          %s1009 = smul.addr %s1008, 64
          %s1010 = scalar_lea.hbm %s3, %s1009
          %s1011 = sshll.u32 %s1000, 4
          %s1012 = int_to_ptr.vmem [resolvable:$true] %s1011
          %1017 = dma.vmem_to_hbm [thread:$0]  %s1012, 2048, %s1010, %s997, 1024, 1024, 64
        $region44: #{tpu_custom_call.1} parent=31 // pred_fallthru
          _
      $region32: #{tpu_custom_call.1} parent=5 // pred_fallthru
        _
      %p1018 = scmp.le.s32.totalorder 2, %s18
      // Predicated region
      $region45: #{tpu_custom_call.1} parent=5 // pred_check
        %p1019 = pneg %p1018
      $region46: #{tpu_custom_call.1} parent=5 // pred_check_branch
        %1021 = sbr.rel (%p1019) target = $region48
      $region47: #{tpu_custom_call.1} parent=5 // pred_region
        %s1022 = ssub.s32 %s18, 2
        // Predicated region
        $region49: #{tpu_custom_call.1} parent=47 // pred_check
          %p1023 = pneg %p125
        $region50: #{tpu_custom_call.1} parent=47 // pred_check_branch
          %1025 = sbr.rel (%p1023) target = $region52
        $region51: #{tpu_custom_call.1} parent=47 // pred_region
          %s1026 = sand.u32 %s110, 1
          %s1027 = scalar_lea.sflag [#allocation4], %s1026
          %s1028 = sand.u32 %s110, 1
          %s1029 = smul.addr %s1028, 128
          %s1030 = scalar_lea.vmem [#allocation7], %s1029
          %1031 = dma.done %s1027, 2048
        $region52: #{tpu_custom_call.1} parent=47 // pred_fallthru
          _
      $region48: #{tpu_custom_call.1} parent=5 // pred_fallthru
        _
    $region6: #{tpu_custom_call.1} parent=1 // loop_footer
      %s22 = sadd.s32 1, %s18
    $region7: #{tpu_custom_call.1} parent=1 // loop_footer_branch
      %17 = sbr.rel target = $region3
    $region8: #{tpu_custom_call.1} parent=1 // loop_exit
      _
    %1032 = vsyncpa [#allocation3], 1
    %s1033 = scalar_lea.sflag [#allocation3], 1
    %1034 = vsyncpa %s1033, 1
    %1035 = vsyncpa [#allocation6], 1
    %s1036 = scalar_lea.sflag [#allocation6], 1
    %1037 = vsyncpa %s1036, 1
    %1038 = vsyncpa [#allocation4], 1
    %s1039 = scalar_lea.sflag [#allocation4], 1
    %1040 = vsyncpa %s1039, 1

</llo_original>
